<compile_context>
chip_gen: v6e
topology: v6e:2x2x1
jax: 0.10.0
libtpu: 0.0.40
codegen_flags: <defaults>
</compile_context>

<pallas_src>
import jax
import jax.numpy as jnp
from jax.experimental import pallas as pl
from jax.experimental.pallas import tpu as pltpu

LN_EPS = 1e-5  # PyTorch nn.LayerNorm default


def _round_up(n, m):
    return ((n + m - 1) // m) * m


def _ln_cols(h):
    """LayerNorm over the feature axis in feature-major layout (features on
    sublanes, batch on lanes). Affine params are folded into the next Linear,
    so only centering + rsqrt scaling happens here."""
    mean = jnp.mean(h, axis=0, keepdims=True)
    centered = h - mean
    var = jnp.mean(centered * centered, axis=0, keepdims=True)
    return centered * jax.lax.rsqrt(var + LN_EPS)


def ffn_kernel(x_ref, w1_ref, b1_ref, w2t_ref, b2_ref, w3_ref, b3_ref, o_ref):
    x = x_ref[...]                                                   # (tb, 768)

    # Linear(768 -> 32) on the MXU, f32 accumulation.
    h1 = jnp.dot(x, w1_ref[...], preferred_element_type=jnp.float32)  # (tb, 32)

    # Switch to feature-major / batch-on-lanes for the narrow tail (XLU
    # transpose of a few vregs; overlaps with MXU/DMA of the next tile).
    h1 = h1.T                                                        # (32, tb)
    h1 = jnp.maximum(h1 + b1_ref[...], 0.0)                          # bias+ReLU
    h1 = _ln_cols(h1)                                                # LN(32)

    # Linear(32 -> 8): tiny matmul, (8,32) @ (32,tb) -> (8,tb).
    h2 = jnp.dot(w2t_ref[...], h1, preferred_element_type=jnp.float32)
    h2 = jnp.maximum(h2 + b2_ref[...], 0.0)
    h2 = _ln_cols(h2)                                                # LN(8)

    # Linear(8 -> 1) on the VPU: weighted sum over 8 sublanes + bias.
    out = jnp.sum(h2 * w3_ref[...], axis=0, keepdims=True) + b3_ref[...]  # (1,tb)

    o_ref[...] = out[None].astype(o_ref.dtype)                       # (1,1,tb)


def bert_cls_ffn_head(x, params, *, batch_tile=None, matmul_dtype=None):
    """x: [B, 768] BERT pooler output. Returns scores of shape [B]."""
    B, H = x.shape
    assert H == 768

    (w1, b1, g1, be1, w2, b2, g2, be2, w3, b3) = params

    # Fold LayerNorm affine params into the following Linear (exact rewrite):
    #   (n*g + be) @ W + b  ==  n @ (g^T * W) + (be @ W + b)
    w2t = (g1.reshape(-1, 1) * w2).T                                  # (8, 32)
    b2f = (be1.reshape(1, -1) @ w2 + b2.reshape(1, -1)).reshape(-1, 1)  # (8, 1)
    w3f = g2.reshape(-1, 1) * w3                                      # (8, 1)
    b3f = (be2.reshape(1, -1) @ w3 + b3.reshape(1, -1)).reshape(1, 1)  # (1, 1)
    b1c = b1.reshape(-1, 1)                                           # (32, 1)

    if matmul_dtype is not None:
        # Halve x HBM traffic; accumulation stays f32 inside the kernel.
        x = x.astype(matmul_dtype)
        w1 = w1.astype(matmul_dtype)

    # Batch tile: multiple of 8; 512 rows (~1.5 MiB x 2 buffers) keeps VMEM
    # headroom on every generation while giving the pipeline many grid steps.
    if batch_tile is None:
        tb = min(512, _round_up(B, 8))
    else:
        tb = _round_up(batch_tile, 8)

    B_pad = _round_up(B, tb)
    if B_pad != B:
        x = jnp.pad(x, ((0, B_pad - B), (0, 0)))
    G = B_pad // tb

    full = lambda a: pl.BlockSpec(a.shape, lambda i: (0, 0))  # resident weights

    out = pl.pallas_call(
        ffn_kernel,
        out_shape=jax.ShapeDtypeStruct((G, 1, tb), jnp.float32),
        grid_spec=pltpu.PrefetchScalarGridSpec(
            num_scalar_prefetch=0,
            grid=(G,),
            in_specs=[
                pl.BlockSpec((tb, H), lambda i: (i, 0)),   # x, pipelined
                full(w1), full(b1c),
                full(w2t), full(b2f),
                full(w3f), full(b3f),
            ],
            # Lane-dense output: one (1, tb) row of scores per grid step.
            out_specs=pl.BlockSpec((1, 1, tb), lambda i: (i, 0, 0)),
        ),
        compiler_params=pltpu.CompilerParams(
            dimension_semantics=("parallel",)),
    )(x, w1, b1c, w2t, b2f, w3f, b3f)

    return out.reshape(-1)[:B]


def init_params(key):
    """Deterministic synthetic parameters matching the nn.Sequential shapes."""
    ks = jax.random.split(key, 6)
    w1 = jax.random.normal(ks[0], (768, 32), jnp.float32) * 0.02
    b1 = jax.random.normal(ks[1], (1, 32), jnp.float32) * 0.02
    g1 = jnp.ones((1, 32), jnp.float32) * 1.1
    be1 = jnp.ones((1, 32), jnp.float32) * 0.05
    w2 = jax.random.normal(ks[2], (32, 8), jnp.float32) * 0.1
    b2 = jax.random.normal(ks[3], (1, 8), jnp.float32) * 0.1
    g2 = jnp.ones((1, 8), jnp.float32) * 0.9
    be2 = jnp.ones((1, 8), jnp.float32) * -0.02
    w3 = jax.random.normal(ks[4], (8, 1), jnp.float32) * 0.1
    b3 = jax.random.normal(ks[5], (1, 1), jnp.float32) * 0.1
    return (w1, b1, g1, be1, w2, b2, g2, be2, w3, b3)


def reference(x, params):
    """Pure-JAX reference of the FFN head (unfused, row-major) for checking."""
    (w1, b1, g1, be1, w2, b2, g2, be2, w3, b3) = params

    def ln(h, g, be):
        mean = jnp.mean(h, axis=-1, keepdims=True)
        c = h - mean
        var = jnp.mean(c * c, axis=-1, keepdims=True)
        return c * jax.lax.rsqrt(var + LN_EPS) * g + be

    h = jnp.maximum(x @ w1 + b1, 0.0)
    h = ln(h, g1, be1)
    h = jnp.maximum(h @ w2 + b2, 0.0)
    h = ln(h, g2, be2)
    return (h @ w3 + b3).reshape(-1)


if __name__ == "__main__":
    key = jax.random.PRNGKey(0)
    k_x, k_p = jax.random.split(key)
    params = init_params(k_p)

    # Small test 1: single-tile path (B=8, stands in for BERT pooler_output).
    B = 8
    x = jax.random.normal(k_x, (B, 768), jnp.float32)
    scores = jax.block_until_ready(bert_cls_ffn_head(x, params))
    ref = reference(x, params)
    assert scores.shape == (B,)
    assert jnp.allclose(scores, ref, atol=1e-4, rtol=1e-4), (scores, ref)

    # Small test 2: multi-step pipelined grid + batch padding (B=20, tile=8).
    B2 = 20
    x2 = jax.random.normal(jax.random.PRNGKey(1), (B2, 768), jnp.float32)
    scores2 = jax.block_until_ready(
        bert_cls_ffn_head(x2, params, batch_tile=8))
    ref2 = reference(x2, params)
    assert scores2.shape == (B2,)
    assert jnp.allclose(scores2, ref2, atol=1e-4, rtol=1e-4), (scores2, ref2)

    print("KERNEL_OK")
</pallas_src>

<mosaic_0001>
module attributes {stable_mosaic.version = 11 : i64} {
  func.func @ffn_kernel(%arg0: i32, %arg1: memref<8x768xf32, #tpu.memory_space<vmem>>, %arg2: memref<768x32xf32, #tpu.memory_space<vmem>>, %arg3: memref<32x1xf32, #tpu.memory_space<vmem>>, %arg4: memref<8x32xf32, #tpu.memory_space<vmem>>, %arg5: memref<8x1xf32, #tpu.memory_space<vmem>>, %arg6: memref<8x1xf32, #tpu.memory_space<vmem>>, %arg7: memref<1x1xf32, #tpu.memory_space<vmem>>, %arg8: memref<1x1x8xf32, #tpu.memory_space<vmem>>) attributes {dimension_semantics = [#tpu.dimension_semantics<parallel>], iteration_bounds = array<i64: 1>, scalar_prefetch = 0 : i64, scratch_operands = 0 : i64, tpu.core_type = #tpu.core_type<tc>, window_params = [{transform_indices = @transform_0, window_bounds = array<i64: 8, 768>}, {pipeline_mode = #tpu.pipeline_mode<synchronous>, transform_indices = @transform_1, window_bounds = array<i64: 768, 32>}, {pipeline_mode = #tpu.pipeline_mode<synchronous>, transform_indices = @transform_2, window_bounds = array<i64: 32, 1>}, {pipeline_mode = #tpu.pipeline_mode<synchronous>, transform_indices = @transform_3, window_bounds = array<i64: 8, 32>}, {pipeline_mode = #tpu.pipeline_mode<synchronous>, transform_indices = @transform_4, window_bounds = array<i64: 8, 1>}, {pipeline_mode = #tpu.pipeline_mode<synchronous>, transform_indices = @transform_5, window_bounds = array<i64: 8, 1>}, {pipeline_mode = #tpu.pipeline_mode<synchronous>, transform_indices = @transform_6, window_bounds = array<i64: 1, 1>}, {transform_indices = @transform_7, window_bounds = array<i64: 1, 1, 8>}]} {
    %c0 = arith.constant 0 : index
    %c0_0 = arith.constant 0 : index
    %0 = vector.load %arg1[%c0, %c0_0] : memref<8x768xf32, #tpu.memory_space<vmem>>, vector<8x768xf32>
    %c0_1 = arith.constant 0 : index
    %c0_2 = arith.constant 0 : index
    %1 = vector.load %arg2[%c0_1, %c0_2] : memref<768x32xf32, #tpu.memory_space<vmem>>, vector<768x32xf32>
    %cst = arith.constant dense<0.000000e+00> : vector<8x32xf32>
    %2 = tpu.matmul %0, %1, %cst {dimension_numbers = #tpu.dot_dimension_numbers<[1], [0], [0], [1], [0, 0, 1, 1], [], []>} : vector<8x768xf32>, vector<768x32xf32>, vector<8x32xf32> -> vector<8x32xf32>
    %3 = tpu.transpose %2, [1, 0] : vector<8x32xf32> -> vector<32x8xf32>
    %c0_3 = arith.constant 0 : index
    %c0_4 = arith.constant 0 : index
    %4 = vector.load %arg3[%c0_3, %c0_4] : memref<32x1xf32, #tpu.memory_space<vmem>>, vector<32x1xf32>
    %5 = vector.broadcast %4 : vector<32x1xf32> to vector<32x8xf32>
    %6 = arith.addf %3, %5 : vector<32x8xf32>
    %cst_5 = arith.constant 0.000000e+00 : f32
    %7 = vector.broadcast %cst_5 : f32 to vector<32x8xf32>
    %8 = arith.maximumf %6, %7 : vector<32x8xf32>
    %cst_6 = arith.constant dense<0.000000e+00> : vector<8xf32>
    %9 = vector.multi_reduction <add>, %8, %cst_6 [0] : vector<32x8xf32> to vector<8xf32>
    %10 = vector.shape_cast %9 : vector<8xf32> to vector<1x8xf32>
    %cst_7 = arith.constant 3.200000e+01 : f32
    %11 = vector.broadcast %cst_7 : f32 to vector<1x8xf32>
    %12 = arith.divf %10, %11 : vector<1x8xf32>
    %13 = vector.broadcast %12 : vector<1x8xf32> to vector<32x8xf32>
    %14 = arith.subf %8, %13 : vector<32x8xf32>
    %15 = arith.mulf %14, %14 : vector<32x8xf32>
    %cst_8 = arith.constant dense<0.000000e+00> : vector<8xf32>
    %16 = vector.multi_reduction <add>, %15, %cst_8 [0] : vector<32x8xf32> to vector<8xf32>
    %17 = vector.shape_cast %16 : vector<8xf32> to vector<1x8xf32>
    %cst_9 = arith.constant 3.200000e+01 : f32
    %18 = vector.broadcast %cst_9 : f32 to vector<1x8xf32>
    %19 = arith.divf %17, %18 : vector<1x8xf32>
    %cst_10 = arith.constant 9.99999974E-6 : f32
    %20 = vector.broadcast %cst_10 : f32 to vector<1x8xf32>
    %21 = arith.addf %19, %20 : vector<1x8xf32>
    %22 = math.rsqrt %21 : vector<1x8xf32>
    %23 = vector.broadcast %22 : vector<1x8xf32> to vector<32x8xf32>
    %24 = arith.mulf %14, %23 : vector<32x8xf32>
    %c0_11 = arith.constant 0 : index
    %c0_12 = arith.constant 0 : index
    %25 = vector.load %arg4[%c0_11, %c0_12] : memref<8x32xf32, #tpu.memory_space<vmem>>, vector<8x32xf32>
    %cst_13 = arith.constant dense<0.000000e+00> : vector<8x8xf32>
    %26 = tpu.matmul %25, %24, %cst_13 {dimension_numbers = #tpu.dot_dimension_numbers<[1], [0], [0], [1], [0, 0, 1, 1], [], []>} : vector<8x32xf32>, vector<32x8xf32>, vector<8x8xf32> -> vector<8x8xf32>
    %c0_14 = arith.constant 0 : index
    %c0_15 = arith.constant 0 : index
    %27 = vector.load %arg5[%c0_14, %c0_15] : memref<8x1xf32, #tpu.memory_space<vmem>>, vector<8x1xf32>
    %28 = vector.broadcast %27 : vector<8x1xf32> to vector<8x8xf32>
    %29 = arith.addf %26, %28 : vector<8x8xf32>
    %cst_16 = arith.constant 0.000000e+00 : f32
    %30 = vector.broadcast %cst_16 : f32 to vector<8x8xf32>
    %31 = arith.maximumf %29, %30 : vector<8x8xf32>
    %cst_17 = arith.constant dense<0.000000e+00> : vector<8xf32>
    %32 = vector.multi_reduction <add>, %31, %cst_17 [0] : vector<8x8xf32> to vector<8xf32>
    %33 = vector.shape_cast %32 : vector<8xf32> to vector<1x8xf32>
    %cst_18 = arith.constant 8.000000e+00 : f32
    %34 = vector.broadcast %cst_18 : f32 to vector<1x8xf32>
    %35 = arith.divf %33, %34 : vector<1x8xf32>
    %36 = vector.broadcast %35 : vector<1x8xf32> to vector<8x8xf32>
    %37 = arith.subf %31, %36 : vector<8x8xf32>
    %38 = arith.mulf %37, %37 : vector<8x8xf32>
    %cst_19 = arith.constant dense<0.000000e+00> : vector<8xf32>
    %39 = vector.multi_reduction <add>, %38, %cst_19 [0] : vector<8x8xf32> to vector<8xf32>
    %40 = vector.shape_cast %39 : vector<8xf32> to vector<1x8xf32>
    %cst_20 = arith.constant 8.000000e+00 : f32
    %41 = vector.broadcast %cst_20 : f32 to vector<1x8xf32>
    %42 = arith.divf %40, %41 : vector<1x8xf32>
    %cst_21 = arith.constant 9.99999974E-6 : f32
    %43 = vector.broadcast %cst_21 : f32 to vector<1x8xf32>
    %44 = arith.addf %42, %43 : vector<1x8xf32>
    %45 = math.rsqrt %44 : vector<1x8xf32>
    %46 = vector.broadcast %45 : vector<1x8xf32> to vector<8x8xf32>
    %47 = arith.mulf %37, %46 : vector<8x8xf32>
    %c0_22 = arith.constant 0 : index
    %c0_23 = arith.constant 0 : index
    %48 = vector.load %arg6[%c0_22, %c0_23] : memref<8x1xf32, #tpu.memory_space<vmem>>, vector<8x1xf32>
    %49 = vector.broadcast %48 : vector<8x1xf32> to vector<8x8xf32>
    %50 = arith.mulf %47, %49 : vector<8x8xf32>
    %cst_24 = arith.constant dense<0.000000e+00> : vector<8xf32>
    %51 = vector.multi_reduction <add>, %50, %cst_24 [0] : vector<8x8xf32> to vector<8xf32>
    %52 = vector.shape_cast %51 : vector<8xf32> to vector<1x8xf32>
    %c0_25 = arith.constant 0 : index
    %c0_26 = arith.constant 0 : index
    %53 = vector.load %arg7[%c0_25, %c0_26] : memref<1x1xf32, #tpu.memory_space<vmem>>, vector<1x1xf32>
    %54 = vector.broadcast %53 : vector<1x1xf32> to vector<1x8xf32>
    %55 = arith.addf %52, %54 : vector<1x8xf32>
    %56 = vector.shape_cast %55 : vector<1x8xf32> to vector<1x1x8xf32>
    %c0_27 = arith.constant 0 : index
    %c0_28 = arith.constant 0 : index
    %c0_29 = arith.constant 0 : index
    %57 = vector.load %arg8[%c0_27, %c0_28, %c0_29] : memref<1x1x8xf32, #tpu.memory_space<vmem>>, vector<1x1x8xf32>
    tpu.vector_store %arg8[%c0_27, %c0_28, %c0_29], %56 {strides = array<i32>} : memref<1x1x8xf32, #tpu.memory_space<vmem>>, vector<1x1x8xf32>,
    return
  }
  func.func @transform_0(%arg0: i32) -> (i32, i32) {
    %c0_i32 = arith.constant 0 : i32
    %c0_i32_0 = arith.constant 0 : i32
    return %arg0, %c0_i32 : i32, i32
  }
  func.func @transform_1(%arg0: i32) -> (i32, i32) {
    %c0_i32 = arith.constant 0 : i32
    %c0_i32_0 = arith.constant 0 : i32
    %c0_i32_1 = arith.constant 0 : i32
    return %c0_i32, %c0_i32_0 : i32, i32
  }
  func.func @transform_2(%arg0: i32) -> (i32, i32) {
    %c0_i32 = arith.constant 0 : i32
    %c0_i32_0 = arith.constant 0 : i32
    %c0_i32_1 = arith.constant 0 : i32
    return %c0_i32, %c0_i32_0 : i32, i32
  }
  func.func @transform_3(%arg0: i32) -> (i32, i32) {
    %c0_i32 = arith.constant 0 : i32
    %c0_i32_0 = arith.constant 0 : i32
    %c0_i32_1 = arith.constant 0 : i32
    return %c0_i32, %c0_i32_0 : i32, i32
  }
  func.func @transform_4(%arg0: i32) -> (i32, i32) {
    %c0_i32 = arith.constant 0 : i32
    %c0_i32_0 = arith.constant 0 : i32
    %c0_i32_1 = arith.constant 0 : i32
    return %c0_i32, %c0_i32_0 : i32, i32
  }
  func.func @transform_5(%arg0: i32) -> (i32, i32) {
    %c0_i32 = arith.constant 0 : i32
    %c0_i32_0 = arith.constant 0 : i32
    %c0_i32_1 = arith.constant 0 : i32
    return %c0_i32, %c0_i32_0 : i32, i32
  }
  func.func @transform_6(%arg0: i32) -> (i32, i32) {
    %c0_i32 = arith.constant 0 : i32
    %c0_i32_0 = arith.constant 0 : i32
    %c0_i32_1 = arith.constant 0 : i32
    return %c0_i32, %c0_i32_0 : i32, i32
  }
  func.func @transform_7(%arg0: i32) -> (i32, i32, i32) {
    %c0_i32 = arith.constant 0 : i32
    %c0_i32_0 = arith.constant 0 : i32
    %c0_i32_1 = arith.constant 0 : i32
    return %arg0, %c0_i32, %c0_i32_0 : i32, i32, i32
  }
}

</mosaic_0001>

<llo_original>
// kernel: tpu_custom_call.1
$region0: #{tpu_custom_call.1}
  #allocation0 [shape = 'u32[]', space=smem, size = 0x4, offset = 0x4, fixed_abs, tag = 'smem constant byte address 0x4 - core index']
  #allocation1 [shape = 'u32[144,128]{1,0:T(1,128)}', space=vmem, size = 0x12000, scoped, tag = 'internal scratch']
  #allocation2 [shape = 'f32[1,1]{1,0:T(1,128)S(1)}', space=vmem, size = 0x200, scoped, tag = 'scoped memory for tpu_custom_call.1']
  %s0 = inlined_call_operand.vmem [shape: f32[8,768], index: 0, kind: input, shape index: {}]
  %s1 = inlined_call_operand.vmem [shape: f32[768,32], index: 1, kind: input, shape index: {}]
  %s2 = inlined_call_operand.vmem [shape: f32[32,1], index: 2, kind: input, shape index: {}]
  %s3 = inlined_call_operand.vmem [shape: f32[8,32], index: 3, kind: input, shape index: {}]
  %s4 = inlined_call_operand.vmem [shape: f32[8,1], index: 4, kind: input, shape index: {}]
  %s5 = inlined_call_operand.vmem [shape: f32[8,1], index: 5, kind: input, shape index: {}]
  %s6 = inlined_call_operand.<no memory space> [shape: f32[1,1], index: 6, kind: input, shape index: {}]
  %s7 = inlined_call_operand.hbm [shape: f32[1,1,8], index: 7, kind: output, shape index: {}]
  %s8 = sld [smem:[#allocation0]]
  $region38: #{tpu_custom_call.1} parent=0
    _
  %s10 = ssub.s32 1, %s8
  %s11 = scalar_select 0, %s10, %s8
  %v12 = vstv %s6
  %13 = vst [vmem:[#allocation2] sm:$0x1] %v12
  $region1: #{tpu_custom_call.1} parent=0
    #allocation3 [shape = 'u8[512]{0}', space=vmem, size = 0x400, scoped, tag = 'output window, operand 0, single buffered']
    #allocation4 [shape = 's32[1]{0}', space=sflag, size = 0x4, scoped, tag = 'scoped memory for tpu_custom_call.1']
    %14 = vsyncpa [#allocation4], 0
    // Predicated region
    $region2: #{tpu_custom_call.1} parent=1 // pred_check
      _
    $region3: #{tpu_custom_call.1} parent=1 // pred_check_branch
      %16 = sbr.rel (0) target = $region5
    $region4: #{tpu_custom_call.1} parent=1 // pred_region
      _
    $region5: #{tpu_custom_call.1} parent=1 // pred_fallthru
      _
    // Predicated region
    $region6: #{tpu_custom_call.1} parent=1 // pred_check
      _
    $region7: #{tpu_custom_call.1} parent=1 // pred_check_branch
      %18 = sbr.rel (0) target = $region9
    $region8: #{tpu_custom_call.1} parent=1 // pred_region
      _
    $region9: #{tpu_custom_call.1} parent=1 // pred_fallthru
      _
    // Predicated region
    $region10: #{tpu_custom_call.1} parent=1 // pred_check
      _
    $region11: #{tpu_custom_call.1} parent=1 // pred_check_branch
      %20 = sbr.rel (0) target = $region13
    $region12: #{tpu_custom_call.1} parent=1 // pred_region
      _
    $region13: #{tpu_custom_call.1} parent=1 // pred_fallthru
      _
    // Predicated region
    $region14: #{tpu_custom_call.1} parent=1 // pred_check
      _
    $region15: #{tpu_custom_call.1} parent=1 // pred_check_branch
      %22 = sbr.rel (0) target = $region17
    $region16: #{tpu_custom_call.1} parent=1 // pred_region
      _
    $region17: #{tpu_custom_call.1} parent=1 // pred_fallthru
      _
    // Predicated region
    $region18: #{tpu_custom_call.1} parent=1 // pred_check
      _
    $region19: #{tpu_custom_call.1} parent=1 // pred_check_branch
      %24 = sbr.rel (0) target = $region21
    $region20: #{tpu_custom_call.1} parent=1 // pred_region
      _
    $region21: #{tpu_custom_call.1} parent=1 // pred_fallthru
      _
    // Predicated region
    $region22: #{tpu_custom_call.1} parent=1 // pred_check
      _
    $region23: #{tpu_custom_call.1} parent=1 // pred_check_branch
      %26 = sbr.rel (0) target = $region25
    $region24: #{tpu_custom_call.1} parent=1 // pred_region
      _
    $region25: #{tpu_custom_call.1} parent=1 // pred_fallthru
      _
    // Predicated region
    $region26: #{tpu_custom_call.1} parent=1 // pred_check
      _
    $region27: #{tpu_custom_call.1} parent=1 // pred_check_branch
      %28 = sbr.rel (0) target = $region29
    $region28: #{tpu_custom_call.1} parent=1 // pred_region
      _
    $region29: #{tpu_custom_call.1} parent=1 // pred_fallthru
      _
    %v29 = vld [vmem:[%s0] sm:$0xff]
    %v30 = vld [vmem:[%s0 + $0x8] sm:$0xff]
    %v31 = vld [vmem:[%s0 + $0x10] sm:$0xff]
    %v32 = vld [vmem:[%s0 + $0x18] sm:$0xff]
    %v33 = vld [vmem:[%s0 + $0x20] sm:$0xff]
    %v34 = vld [vmem:[%s0 + $0x28] sm:$0xff]
    %v35 = vld [vmem:[%s1] sm:$0xff]
    %v36 = vld [vmem:[%s1 + $0x8] sm:$0xff]
    %v37 = vld [vmem:[%s1 + $0x10] sm:$0xff]
    %v38 = vld [vmem:[%s1 + $0x18] sm:$0xff]
    %v39 = vld [vmem:[%s1 + $0x20] sm:$0xff]
    %v40 = vld [vmem:[%s1 + $0x28] sm:$0xff]
    %v41 = vld [vmem:[%s1 + $0x30] sm:$0xff]
    %v42 = vld [vmem:[%s1 + $0x38] sm:$0xff]
    %v43 = vld [vmem:[%s1 + $0x40] sm:$0xff]
    %v44 = vld [vmem:[%s1 + $0x48] sm:$0xff]
    %v45 = vld [vmem:[%s1 + $0x50] sm:$0xff]
    %v46 = vld [vmem:[%s1 + $0x58] sm:$0xff]
    %v47 = vld [vmem:[%s1 + $0x60] sm:$0xff]
    %v48 = vld [vmem:[%s1 + $0x68] sm:$0xff]
    %v49 = vld [vmem:[%s1 + $0x70] sm:$0xff]
    %v50 = vld [vmem:[%s1 + $0x78] sm:$0xff]
    %v51 = vld [vmem:[%s1 + $0x80] sm:$0xff]
    %v52 = vld [vmem:[%s1 + $0x88] sm:$0xff]
    %v53 = vld [vmem:[%s1 + $0x90] sm:$0xff]
    %v54 = vld [vmem:[%s1 + $0x98] sm:$0xff]
    %v55 = vld [vmem:[%s1 + $0xa0] sm:$0xff]
    %v56 = vld [vmem:[%s1 + $0xa8] sm:$0xff]
    %v57 = vld [vmem:[%s1 + $0xb0] sm:$0xff]
    %v58 = vld [vmem:[%s1 + $0xb8] sm:$0xff]
    %v59 = vld [vmem:[%s1 + $0xc0] sm:$0xff]
    %v60 = vld [vmem:[%s1 + $0xc8] sm:$0xff]
    %v61 = vld [vmem:[%s1 + $0xd0] sm:$0xff]
    %v62 = vld [vmem:[%s1 + $0xd8] sm:$0xff]
    %v63 = vld [vmem:[%s1 + $0xe0] sm:$0xff]
    %v64 = vld [vmem:[%s1 + $0xe8] sm:$0xff]
    %v65 = vld [vmem:[%s1 + $0xf0] sm:$0xff]
    %v66 = vld [vmem:[%s1 + $0xf8] sm:$0xff]
    %v67 = vld [vmem:[%s1 + $0x100] sm:$0xff]
    %v68 = vld [vmem:[%s1 + $0x108] sm:$0xff]
    %v69 = vld [vmem:[%s1 + $0x110] sm:$0xff]
    %v70 = vld [vmem:[%s1 + $0x118] sm:$0xff]
    %v71 = vld [vmem:[%s1 + $0x120] sm:$0xff]
    %v72 = vld [vmem:[%s1 + $0x128] sm:$0xff]
    %v73 = vld [vmem:[%s1 + $0x130] sm:$0xff]
    %v74 = vld [vmem:[%s1 + $0x138] sm:$0xff]
    %v75 = vld [vmem:[%s1 + $0x140] sm:$0xff]
    %v76 = vld [vmem:[%s1 + $0x148] sm:$0xff]
    %v77 = vld [vmem:[%s1 + $0x150] sm:$0xff]
    %v78 = vld [vmem:[%s1 + $0x158] sm:$0xff]
    %v79 = vld [vmem:[%s1 + $0x160] sm:$0xff]
    %v80 = vld [vmem:[%s1 + $0x168] sm:$0xff]
    %v81 = vld [vmem:[%s1 + $0x170] sm:$0xff]
    %v82 = vld [vmem:[%s1 + $0x178] sm:$0xff]
    %v83 = vld [vmem:[%s1 + $0x180] sm:$0xff]
    %v84 = vld [vmem:[%s1 + $0x188] sm:$0xff]
    %v85 = vld [vmem:[%s1 + $0x190] sm:$0xff]
    %v86 = vld [vmem:[%s1 + $0x198] sm:$0xff]
    %v87 = vld [vmem:[%s1 + $0x1a0] sm:$0xff]
    %v88 = vld [vmem:[%s1 + $0x1a8] sm:$0xff]
    %v89 = vld [vmem:[%s1 + $0x1b0] sm:$0xff]
    %v90 = vld [vmem:[%s1 + $0x1b8] sm:$0xff]
    %v91 = vld [vmem:[%s1 + $0x1c0] sm:$0xff]
    %v92 = vld [vmem:[%s1 + $0x1c8] sm:$0xff]
    %v93 = vld [vmem:[%s1 + $0x1d0] sm:$0xff]
    %v94 = vld [vmem:[%s1 + $0x1d8] sm:$0xff]
    %v95 = vld [vmem:[%s1 + $0x1e0] sm:$0xff]
    %v96 = vld [vmem:[%s1 + $0x1e8] sm:$0xff]
    %v97 = vld [vmem:[%s1 + $0x1f0] sm:$0xff]
    %v98 = vld [vmem:[%s1 + $0x1f8] sm:$0xff]
    %v99 = vld [vmem:[%s1 + $0x200] sm:$0xff]
    %v100 = vld [vmem:[%s1 + $0x208] sm:$0xff]
    %v101 = vld [vmem:[%s1 + $0x210] sm:$0xff]
    %v102 = vld [vmem:[%s1 + $0x218] sm:$0xff]
    %v103 = vld [vmem:[%s1 + $0x220] sm:$0xff]
    %v104 = vld [vmem:[%s1 + $0x228] sm:$0xff]
    %v105 = vld [vmem:[%s1 + $0x230] sm:$0xff]
    %v106 = vld [vmem:[%s1 + $0x238] sm:$0xff]
    %v107 = vld [vmem:[%s1 + $0x240] sm:$0xff]
    %v108 = vld [vmem:[%s1 + $0x248] sm:$0xff]
    %v109 = vld [vmem:[%s1 + $0x250] sm:$0xff]
    %v110 = vld [vmem:[%s1 + $0x258] sm:$0xff]
    %v111 = vld [vmem:[%s1 + $0x260] sm:$0xff]
    %v112 = vld [vmem:[%s1 + $0x268] sm:$0xff]
    %v113 = vld [vmem:[%s1 + $0x270] sm:$0xff]
    %v114 = vld [vmem:[%s1 + $0x278] sm:$0xff]
    %v115 = vld [vmem:[%s1 + $0x280] sm:$0xff]
    %v116 = vld [vmem:[%s1 + $0x288] sm:$0xff]
    %v117 = vld [vmem:[%s1 + $0x290] sm:$0xff]
    %v118 = vld [vmem:[%s1 + $0x298] sm:$0xff]
    %v119 = vld [vmem:[%s1 + $0x2a0] sm:$0xff]
    %v120 = vld [vmem:[%s1 + $0x2a8] sm:$0xff]
    %v121 = vld [vmem:[%s1 + $0x2b0] sm:$0xff]
    %v122 = vld [vmem:[%s1 + $0x2b8] sm:$0xff]
    %v123 = vld [vmem:[%s1 + $0x2c0] sm:$0xff]
    %v124 = vld [vmem:[%s1 + $0x2c8] sm:$0xff]
    %v125 = vld [vmem:[%s1 + $0x2d0] sm:$0xff]
    %v126 = vld [vmem:[%s1 + $0x2d8] sm:$0xff]
    %v127 = vld [vmem:[%s1 + $0x2e0] sm:$0xff]
    %v128 = vld [vmem:[%s1 + $0x2e8] sm:$0xff]
    %v129 = vld [vmem:[%s1 + $0x2f0] sm:$0xff]
    %v130 = vld [vmem:[%s1 + $0x2f8] sm:$0xff]
    %131 = vmatprep.subr.mxu0 0.0
    %132 = vmatpush1.msra.mxu0 %v50
    %133 = vmatprep.subr.mxu0 0.0
    %134 = vmatpush1.msra.mxu0 %v49
    %135 = vmatprep.subr.mxu0 0.0
    %136 = vmatpush1.msra.mxu0 %v48
    %137 = vmatprep.subr.mxu0 0.0
    %138 = vmatpush1.msra.mxu0 %v47
    %139 = vmatprep.subr.mxu0 0.0
    %140 = vmatpush1.msra.mxu0 %v46
    %141 = vmatprep.subr.mxu0 0.0
    %142 = vmatpush1.msra.mxu0 %v45
    %143 = vmatprep.subr.mxu0 0.0
    %144 = vmatpush1.msra.mxu0 %v44
    %145 = vmatprep.subr.mxu0 0.0
    %146 = vmatpush1.msra.mxu0 %v43
    %147 = vmatprep.subr.mxu0 0.0
    %148 = vmatpush1.msra.mxu0 %v42
    %149 = vmatprep.subr.mxu0 0.0
    %150 = vmatpush1.msra.mxu0 %v41
    %151 = vmatprep.subr.mxu0 0.0
    %152 = vmatpush1.msra.mxu0 %v40
    %153 = vmatprep.subr.mxu0 0.0
    %154 = vmatpush1.msra.mxu0 %v39
    %155 = vmatprep.subr.mxu0 0.0
    %156 = vmatpush1.msra.mxu0 %v38
    %157 = vmatprep.subr.mxu0 0.0
    %158 = vmatpush1.msra.mxu0 %v37
    %159 = vmatprep.subr.mxu0 0.0
    %160 = vmatpush1.msra.mxu0 %v36
    %161 = vmatprep.subr.mxu0 0.0
    %162 = vmatpush1.msra.mxu0 %v35
    %163 = vmatprep.subr.mxu0 0.0
    %164 = vmatpush2.msra.mxu0 %v66
    %165 = vmatprep.subr.mxu0 0.0
    %166 = vmatpush2.msra.mxu0 %v65
    %167 = vmatprep.subr.mxu0 0.0
    %168 = vmatpush2.msra.mxu0 %v64
    %169 = vmatprep.subr.mxu0 0.0
    %170 = vmatpush2.msra.mxu0 %v63
    %171 = vmatprep.subr.mxu0 0.0
    %172 = vmatpush2.msra.mxu0 %v62
    %173 = vmatprep.subr.mxu0 0.0
    %174 = vmatpush2.msra.mxu0 %v61
    %175 = vmatprep.subr.mxu0 0.0
    %176 = vmatpush2.msra.mxu0 %v60
    %177 = vmatprep.subr.mxu0 0.0
    %178 = vmatpush2.msra.mxu0 %v59
    %179 = vmatprep.subr.mxu0 0.0
    %180 = vmatpush2.msra.mxu0 %v58
    %181 = vmatprep.subr.mxu0 0.0
    %182 = vmatpush2.msra.mxu0 %v57
    %183 = vmatprep.subr.mxu0 0.0
    %184 = vmatpush2.msra.mxu0 %v56
    %185 = vmatprep.subr.mxu0 0.0
    %186 = vmatpush2.msra.mxu0 %v55
    %187 = vmatprep.subr.mxu0 0.0
    %188 = vmatpush2.msra.mxu0 %v54
    %189 = vmatprep.subr.mxu0 0.0
    %190 = vmatpush2.msra.mxu0 %v53
    %191 = vmatprep.subr.mxu0 0.0
    %192 = vmatpush2.msra.mxu0 %v52
    %193 = vmatprep.subr.mxu0 0.0
    %194 = vmatpush2.msra.mxu0 %v51
    %195 = vmatprep.mubr.f32.mxu0 %v30
    %196 = vmatmul.mubr.f32.gmra.mxu0 %v29
    %v197 = vpop.f32.mrf.mxu0
    %v198 = vadd.f32 0.0, %v197
    %v199 = vpop.f32.mrf.mxu0
    %200 = vdwg.mxu0
    %201 = vmatprep.subr.mxu0 0.0
    %202 = vmatpush1.msra.mxu0 %v82
    %203 = vmatprep.subr.mxu0 0.0
    %204 = vmatpush1.msra.mxu0 %v81
    %205 = vmatprep.subr.mxu0 0.0
    %206 = vmatpush1.msra.mxu0 %v80
    %207 = vmatprep.subr.mxu0 0.0
    %208 = vmatpush1.msra.mxu0 %v79
    %209 = vmatprep.subr.mxu0 0.0
    %210 = vmatpush1.msra.mxu0 %v78
    %211 = vmatprep.subr.mxu0 0.0
    %212 = vmatpush1.msra.mxu0 %v77
    %213 = vmatprep.subr.mxu0 0.0
    %214 = vmatpush1.msra.mxu0 %v76
    %215 = vmatprep.subr.mxu0 0.0
    %216 = vmatpush1.msra.mxu0 %v75
    %217 = vmatprep.subr.mxu0 0.0
    %218 = vmatpush1.msra.mxu0 %v74
    %219 = vmatprep.subr.mxu0 0.0
    %220 = vmatpush1.msra.mxu0 %v73
    %221 = vmatprep.subr.mxu0 0.0
    %222 = vmatpush1.msra.mxu0 %v72
    %223 = vmatprep.subr.mxu0 0.0
    %224 = vmatpush1.msra.mxu0 %v71
    %225 = vmatprep.subr.mxu0 0.0
    %226 = vmatpush1.msra.mxu0 %v70
    %227 = vmatprep.subr.mxu0 0.0
    %228 = vmatpush1.msra.mxu0 %v69
    %229 = vmatprep.subr.mxu0 0.0
    %230 = vmatpush1.msra.mxu0 %v68
    %231 = vmatprep.subr.mxu0 0.0
    %232 = vmatpush1.msra.mxu0 %v67
    %233 = vmatprep.subr.mxu0 0.0
    %234 = vmatpush2.msra.mxu0 %v98
    %235 = vmatprep.subr.mxu0 0.0
    %236 = vmatpush2.msra.mxu0 %v97
    %237 = vmatprep.subr.mxu0 0.0
    %238 = vmatpush2.msra.mxu0 %v96
    %239 = vmatprep.subr.mxu0 0.0
    %240 = vmatpush2.msra.mxu0 %v95
    %241 = vmatprep.subr.mxu0 0.0
    %242 = vmatpush2.msra.mxu0 %v94
    %243 = vmatprep.subr.mxu0 0.0
    %244 = vmatpush2.msra.mxu0 %v93
    %245 = vmatprep.subr.mxu0 0.0
    %246 = vmatpush2.msra.mxu0 %v92
    %247 = vmatprep.subr.mxu0 0.0
    %248 = vmatpush2.msra.mxu0 %v91
    %249 = vmatprep.subr.mxu0 0.0
    %250 = vmatpush2.msra.mxu0 %v90
    %251 = vmatprep.subr.mxu0 0.0
    %252 = vmatpush2.msra.mxu0 %v89
    %253 = vmatprep.subr.mxu0 0.0
    %254 = vmatpush2.msra.mxu0 %v88
    %255 = vmatprep.subr.mxu0 0.0
    %256 = vmatpush2.msra.mxu0 %v87
    %257 = vmatprep.subr.mxu0 0.0
    %258 = vmatpush2.msra.mxu0 %v86
    %259 = vmatprep.subr.mxu0 0.0
    %260 = vmatpush2.msra.mxu0 %v85
    %261 = vmatprep.subr.mxu0 0.0
    %262 = vmatpush2.msra.mxu0 %v84
    %263 = vmatprep.subr.mxu0 0.0
    %264 = vmatpush2.msra.mxu0 %v83
    %265 = vmatprep.mubr.f32.mxu0 %v32
    %266 = vmatmul.mubr.f32.gmra.mxu0 %v31
    %v267 = vpop.f32.mrf.mxu0
    %v268 = vadd.f32 %v198, %v267
    %v269 = vpop.f32.mrf.mxu0
    %270 = vdwg.mxu0
    %271 = vmatprep.subr.mxu0 0.0
    %272 = vmatpush1.msra.mxu0 %v114
    %273 = vmatprep.subr.mxu0 0.0
    %274 = vmatpush1.msra.mxu0 %v113
    %275 = vmatprep.subr.mxu0 0.0
    %276 = vmatpush1.msra.mxu0 %v112
    %277 = vmatprep.subr.mxu0 0.0
    %278 = vmatpush1.msra.mxu0 %v111
    %279 = vmatprep.subr.mxu0 0.0
    %280 = vmatpush1.msra.mxu0 %v110
    %281 = vmatprep.subr.mxu0 0.0
    %282 = vmatpush1.msra.mxu0 %v109
    %283 = vmatprep.subr.mxu0 0.0
    %284 = vmatpush1.msra.mxu0 %v108
    %285 = vmatprep.subr.mxu0 0.0
    %286 = vmatpush1.msra.mxu0 %v107
    %287 = vmatprep.subr.mxu0 0.0
    %288 = vmatpush1.msra.mxu0 %v106
    %289 = vmatprep.subr.mxu0 0.0
    %290 = vmatpush1.msra.mxu0 %v105
    %291 = vmatprep.subr.mxu0 0.0
    %292 = vmatpush1.msra.mxu0 %v104
    %293 = vmatprep.subr.mxu0 0.0
    %294 = vmatpush1.msra.mxu0 %v103
    %295 = vmatprep.subr.mxu0 0.0
    %296 = vmatpush1.msra.mxu0 %v102
    %297 = vmatprep.subr.mxu0 0.0
    %298 = vmatpush1.msra.mxu0 %v101
    %299 = vmatprep.subr.mxu0 0.0
    %300 = vmatpush1.msra.mxu0 %v100
    %301 = vmatprep.subr.mxu0 0.0
    %302 = vmatpush1.msra.mxu0 %v99
    %303 = vmatprep.subr.mxu0 0.0
    %304 = vmatpush2.msra.mxu0 %v130
    %305 = vmatprep.subr.mxu0 0.0
    %306 = vmatpush2.msra.mxu0 %v129
    %307 = vmatprep.subr.mxu0 0.0
    %308 = vmatpush2.msra.mxu0 %v128
    %309 = vmatprep.subr.mxu0 0.0
    %310 = vmatpush2.msra.mxu0 %v127
    %311 = vmatprep.subr.mxu0 0.0
    %312 = vmatpush2.msra.mxu0 %v126
    %313 = vmatprep.subr.mxu0 0.0
    %314 = vmatpush2.msra.mxu0 %v125
    %315 = vmatprep.subr.mxu0 0.0
    %316 = vmatpush2.msra.mxu0 %v124
    %317 = vmatprep.subr.mxu0 0.0
    %318 = vmatpush2.msra.mxu0 %v123
    %319 = vmatprep.subr.mxu0 0.0
    %320 = vmatpush2.msra.mxu0 %v122
    %321 = vmatprep.subr.mxu0 0.0
    %322 = vmatpush2.msra.mxu0 %v121
    %323 = vmatprep.subr.mxu0 0.0
    %324 = vmatpush2.msra.mxu0 %v120
    %325 = vmatprep.subr.mxu0 0.0
    %326 = vmatpush2.msra.mxu0 %v119
    %327 = vmatprep.subr.mxu0 0.0
    %328 = vmatpush2.msra.mxu0 %v118
    %329 = vmatprep.subr.mxu0 0.0
    %330 = vmatpush2.msra.mxu0 %v117
    %331 = vmatprep.subr.mxu0 0.0
    %332 = vmatpush2.msra.mxu0 %v116
    %333 = vmatprep.subr.mxu0 0.0
    %334 = vmatpush2.msra.mxu0 %v115
    %335 = vmatprep.mubr.f32.mxu0 %v34
    %336 = vmatmul.mubr.f32.gmra.mxu0 %v33
    %v337 = vpop.f32.mrf.mxu0
    %v338 = vadd.f32 %v268, %v337
    %v339 = vpop.f32.mrf.mxu0
    %340 = vdwg.mxu0
    %341 = vxpose.xlu0.b32.start [1/16] %v338, 128
    %342 = vxpose.xlu0.b32.cont [2/16] 0.0, 128
    %343 = vxpose.xlu0.b32.cont [3/16] 0.0, 128
    %344 = vxpose.xlu0.b32.cont [4/16] 0.0, 128
    %345 = vxpose.xlu0.b32.cont [5/16] 0.0, 128
    %346 = vxpose.xlu0.b32.cont [6/16] 0.0, 128
    %347 = vxpose.xlu0.b32.cont [7/16] 0.0, 128
    %348 = vxpose.xlu0.b32.cont [8/16] 0.0, 128
    %349 = vxpose.xlu0.b32.cont [9/16] 0.0, 128
    %350 = vxpose.xlu0.b32.cont [10/16] 0.0, 128
    %351 = vxpose.xlu0.b32.cont [11/16] 0.0, 128
    %352 = vxpose.xlu0.b32.cont [12/16] 0.0, 128
    %353 = vxpose.xlu0.b32.cont [13/16] 0.0, 128
    %354 = vxpose.xlu0.b32.cont [14/16] 0.0, 128
    %355 = vxpose.xlu0.b32.cont [15/16] 0.0, 128
    %356 = vxpose.xlu0.b32.end [16/16] 0.0, 128
    %v357 = vpop.trf.xlu0
    %v358 = vpop.trf.xlu0
    %v359 = vpop.trf.xlu0
    %v360 = vpop.trf.xlu0
    %v361 = vpop.trf.xlu0
    %v362 = vpop.trf.xlu0
    %v363 = vpop.trf.xlu0
    %v364 = vpop.trf.xlu0
    %v365 = vpop.trf.xlu0
    %v366 = vpop.trf.xlu0
    %v367 = vpop.trf.xlu0
    %v368 = vpop.trf.xlu0
    %v369 = vpop.trf.xlu0
    %v370 = vpop.trf.xlu0
    %v371 = vpop.trf.xlu0
    %v372 = vpop.trf.xlu0
    %v373 = vld [vmem:[%s2] sm:$0xff]
    %v374 = vld [vmem:[%s2 + $0x8] sm:$0xff]
    %v375 = vld [vmem:[%s2 + $0x10] sm:$0xff]
    %v376 = vld [vmem:[%s2 + $0x18] sm:$0xff]
    %378 = vset.pattern.permute.xlu0 0
    %379 = vperm.xlu0 %378, %v373
    %v380 = vpop.permute.xlu0 %379
    %383 = vset.pattern.permute.xlu0 0
    %384 = vperm.xlu0 %383, %v374
    %v385 = vpop.permute.xlu0 %384
    %388 = vset.pattern.permute.xlu0 0
    %389 = vperm.xlu0 %388, %v375
    %v390 = vpop.permute.xlu0 %389
    %393 = vset.pattern.permute.xlu0 0
    %394 = vperm.xlu0 %393, %v376
    %v395 = vpop.permute.xlu0 %394
    %v397 = vadd.f32 %v357, %v380
    %v398 = vadd.f32 %v358, %v385
    %v399 = vadd.f32 %v359, %v390
    %v400 = vadd.f32 %v360, %v395
    %v401 = vmax.f32 %v397, 0.0
    %v402 = vmax.f32 %v398, 0.0
    %v403 = vmax.f32 %v399, 0.0
    %v404 = vmax.f32 %v400, 0.0
    %vm405 = vcmask 64512
    %v406 = vsel %vm405, %v401, 0.0
    %v407 = vsel %vm405, %v402, 0.0
    %v408 = vadd.f32 %v406, %v407
    %v409 = vsel %vm405, %v403, 0.0
    %v410 = vadd.f32 %v408, %v409
    %v411 = vsel %vm405, %v404, 0.0
    %v412 = vadd.f32 %v410, %v411
    %v413 = vrot.slane %v412, 4
    %v414 = vadd.f32 %v412, %v413
    %v415 = vrot.slane %v414, 2
    %v416 = vadd.f32 %v414, %v415
    %v417 = vrot.slane %v416, 1
    %v418 = vadd.f32 %v416, %v417
    %v419 = vrcp.pop 32.0
    %v420 = vmul.f32 %v418, %v419
    %v421 = vsub.f32 %v401, %v420
    %v422 = vsub.f32 %v402, %v420
    %v423 = vsub.f32 %v403, %v420
    %v424 = vsub.f32 %v404, %v420
    %v425 = vmul.f32 %v421, %v421
    %v426 = vmul.f32 %v422, %v422
    %v427 = vmul.f32 %v423, %v423
    %v428 = vmul.f32 %v424, %v424
    %v429 = vsel %vm405, %v425, 0.0
    %v430 = vsel %vm405, %v426, 0.0
    %v431 = vadd.f32 %v429, %v430
    %v432 = vsel %vm405, %v427, 0.0
    %v433 = vadd.f32 %v431, %v432
    %v434 = vsel %vm405, %v428, 0.0
    %v435 = vadd.f32 %v433, %v434
    %v436 = vrot.slane %v435, 4
    %v437 = vadd.f32 %v435, %v436
    %v438 = vrot.slane %v437, 2
    %v439 = vadd.f32 %v437, %v438
    %v440 = vrot.slane %v439, 1
    %v441 = vadd.f32 %v439, %v440
    %v442 = vmul.f32 %v441, %v419
    %v443 = vadd.f32 %v442, 1e-05
    %v444 = vrsqrt.pop %v443
    %v445 = vmul.f32 %v421, %v444
    %v446 = vmul.f32 %v422, %v444
    %v447 = vmul.f32 %v423, %v444
    %v448 = vmul.f32 %v424, %v444
    %v449 = vld [vmem:[%s3] sm:$0xff]
    %v450 = vld [vmem:[%s4] sm:$0xff]
    %452 = vset.pattern.permute.xlu0 0
    %453 = vperm.xlu0 %452, %v450
    %v454 = vpop.permute.xlu0 %453
    %vm456 = vcmask 261120
    %v458 = vsel %vm456, %v449, 0
    %460 = vmatprep.subr.mxu0 0.0
    %461 = vmatpush1.msra.mxu0 0.0
    %462 = vmatprep.subr.mxu0 0.0
    %463 = vmatpush1.msra.mxu0 0.0
    %464 = vmatprep.subr.mxu0 0.0
    %465 = vmatpush1.msra.mxu0 0.0
    %466 = vmatprep.subr.mxu0 0.0
    %467 = vmatpush1.msra.mxu0 0.0
    %468 = vmatprep.subr.mxu0 0.0
    %469 = vmatpush1.msra.mxu0 0.0
    %470 = vmatprep.subr.mxu0 0.0
    %471 = vmatpush1.msra.mxu0 0.0
    %472 = vmatprep.subr.mxu0 0.0
    %473 = vmatpush1.msra.mxu0 0.0
    %474 = vmatprep.subr.mxu0 0.0
    %475 = vmatpush1.msra.mxu0 0.0
    %476 = vmatprep.subr.mxu0 0.0
    %477 = vmatpush1.msra.mxu0 0.0
    %478 = vmatprep.subr.mxu0 0.0
    %479 = vmatpush1.msra.mxu0 0.0
    %480 = vmatprep.subr.mxu0 0.0
    %481 = vmatpush1.msra.mxu0 0.0
    %482 = vmatprep.subr.mxu0 0.0
    %483 = vmatpush1.msra.mxu0 0.0
    %484 = vmatprep.subr.mxu0 0.0
    %485 = vmatpush1.msra.mxu0 %v448
    %486 = vmatprep.subr.mxu0 0.0
    %487 = vmatpush1.msra.mxu0 %v447
    %488 = vmatprep.subr.mxu0 0.0
    %489 = vmatpush1.msra.mxu0 %v446
    %490 = vmatprep.subr.mxu0 0.0
    %491 = vmatpush1.msra.mxu0 %v445
    %492 = vmatprep.subr.mxu0 0.0
    %493 = vmatpush2.msra.mxu0 0.0
    %494 = vmatprep.subr.mxu0 0.0
    %495 = vmatpush2.msra.mxu0 0.0
    %496 = vmatprep.subr.mxu0 0.0
    %497 = vmatpush2.msra.mxu0 0.0
    %498 = vmatprep.subr.mxu0 0.0
    %499 = vmatpush2.msra.mxu0 0.0
    %500 = vmatprep.subr.mxu0 0.0
    %501 = vmatpush2.msra.mxu0 0.0
    %502 = vmatprep.subr.mxu0 0.0
    %503 = vmatpush2.msra.mxu0 0.0
    %504 = vmatprep.subr.mxu0 0.0
    %505 = vmatpush2.msra.mxu0 0.0
    %506 = vmatprep.subr.mxu0 0.0
    %507 = vmatpush2.msra.mxu0 0.0
    %508 = vmatprep.subr.mxu0 0.0
    %509 = vmatpush2.msra.mxu0 0.0
    %510 = vmatprep.subr.mxu0 0.0
    %511 = vmatpush2.msra.mxu0 0.0
    %512 = vmatprep.subr.mxu0 0.0
    %513 = vmatpush2.msra.mxu0 0.0
    %514 = vmatprep.subr.mxu0 0.0
    %515 = vmatpush2.msra.mxu0 0.0
    %516 = vmatprep.subr.mxu0 0.0
    %517 = vmatpush2.msra.mxu0 0.0
    %518 = vmatprep.subr.mxu0 0.0
    %519 = vmatpush2.msra.mxu0 0.0
    %520 = vmatprep.subr.mxu0 0.0
    %521 = vmatpush2.msra.mxu0 0.0
    %522 = vmatprep.subr.mxu0 0.0
    %523 = vmatpush2.msra.mxu0 0.0
    %524 = vmatprep.mubr.f32.mxu0 0.0
    %525 = vmatmul.mubr.f32.gmra.mxu0 %v458
    %v526 = vpop.f32.mrf.mxu0
    %v527 = vadd.f32 %v454, %v526
    %v528 = vpop.f32.mrf.mxu0
    %529 = vdwg.mxu0
    %v530 = vmax.f32 %v527, 0.0
    %v531 = vsel %vm405, %v530, 0.0
    %v532 = vrot.slane %v531, 4
    %v533 = vadd.f32 %v531, %v532
    %v534 = vrot.slane %v533, 2
    %v535 = vadd.f32 %v533, %v534
    %v536 = vrot.slane %v535, 1
    %v537 = vadd.f32 %v535, %v536
    %v538 = vrcp.pop 8.0
    %v539 = vmul.f32 %v537, %v538
    %v540 = vsub.f32 %v530, %v539
    %v541 = vmul.f32 %v540, %v540
    %v542 = vsel %vm405, %v541, 0.0
    %v543 = vrot.slane %v542, 4
    %v544 = vadd.f32 %v542, %v543
    %v545 = vrot.slane %v544, 2
    %v546 = vadd.f32 %v544, %v545
    %v547 = vrot.slane %v546, 1
    %v548 = vadd.f32 %v546, %v547
    %v549 = vmul.f32 %v548, %v538
    %v550 = vadd.f32 %v549, 1e-05
    %v551 = vrsqrt.pop %v550
    %v552 = vmul.f32 %v540, %v551
    %v553 = vld [vmem:[%s5] sm:$0xff]
    %555 = vset.pattern.permute.xlu0 0
    %556 = vperm.xlu0 %555, %v553
    %v557 = vpop.permute.xlu0 %556
    %v559 = vmul.f32 %v552, %v557
    %v560 = vsel %vm405, %v559, 0.0
    %v561 = vrot.slane %v560, 4
    %v562 = vadd.f32 %v560, %v561
    %v563 = vrot.slane %v562, 2
    %v564 = vadd.f32 %v562, %v563
    %v565 = vrot.slane %v564, 1
    %v566 = vadd.f32 %v564, %v565
    %v567 = vld [vmem:[#allocation2] sm:$0x1]
    %569 = vset.pattern.permute.xlu0 0
    %570 = vperm.xlu0 %569, %v567
    %v571 = vpop.permute.xlu0 %570
    %v573 = vlaneseq
    %v574 = vshrl.u32 %v573, 7
    %v575 = vsub.s32 0, %v574
    %v576 = vrot.slane %v571, %v575
    %v577 = vadd.f32 %v566, %v576
    %vm578 = vcmask 57344
    %579 = vst.msk [vmem:[#allocation3] sm:$0x1] %vm578, %v577
    // Predicated region
    $region30: #{tpu_custom_call.1} parent=1 // pred_check
      _
    $region31: #{tpu_custom_call.1} parent=1 // pred_check_branch
      %581 = sbr.rel (0) target = $region33
    $region32: #{tpu_custom_call.1} parent=1 // pred_region
      %s583 = ssub.s32 16, 16
      %584 = vsyncadd [#allocation4], %s583
      %s586 = sshll.u32 [#allocation3], 4
      %s587 = int_to_ptr.vmem [resolvable:$true] %s586
      %589 = dma.vmem_to_hbm [thread:$0]  %s587, 16, %s7, [#allocation4]
    $region33: #{tpu_custom_call.1} parent=1 // pred_fallthru
      _
    // Predicated region
    $region34: #{tpu_custom_call.1} parent=1 // pred_check
      _
    $region35: #{tpu_custom_call.1} parent=1 // pred_check_branch
      %591 = sbr.rel (0) target = $region37
    $region36: #{tpu_custom_call.1} parent=1 // pred_region
      %592 = dma.done [#allocation4], 16
    $region37: #{tpu_custom_call.1} parent=1 // pred_fallthru
      _
    %593 = vsyncpa [#allocation4], 1

</llo_original>
